<compile_context>
chip_gen: v6e
topology: v6e:2x2x1
jax: 0.10.0
libtpu: 0.0.40
codegen_flags: <defaults>
</compile_context>

<pallas_src>
import functools

import jax
import jax.numpy as jnp
from jax.experimental import pallas as pl
from jax.experimental.pallas import tpu as pltpu

_LANE = 128
_ROWBLK = 16          # bf16-native sublane tile height; neighbour-block height


def _round_up(n, m):
    return ((n + m - 1) // m) * m


def _choose_t_tile(T, max_tile=512):
    """Split T into n equal tiles (multiples of 16, each <= ~max_tile).
    Returns (T_tile, T_pad) with T_pad = n * T_tile >= T."""
    max_tile = max(_ROWBLK, (max_tile // _ROWBLK) * _ROWBLK)
    n = -(-T // max_tile)                       # cdiv
    t_tile = _round_up(-(-T // n), _ROWBLK)
    return t_tile, n * t_tile


# ----------------------------------------------------------------------------
# Pallas kernel: query-gate -> Conv1d(k, same-pad) as K MXU dots -> folded BN
# -> ReLU.  Halo rows come from the 16-row neighbour blocks (masked at edges).
# ----------------------------------------------------------------------------
def _conv_bn_relu_kernel(x_ref, xm_ref, xp_ref, q_ref, w_ref, scale_ref,
                         bias_ref, o_ref, slab_ref, *, K, T_tile, T_real,
                         T_pad):
    # x_ref:  (T_tile, Cin_pad)  bf16   current tile
    # xm_ref: (16, Cin_pad)      bf16   last 16 rows of the previous tile
    # xp_ref: (16, Cin_pad)      bf16   first 16 rows of the next tile
    # q_ref:  (1, Cin_pad)       f32    query gate
    # w_ref:  (K*Cin_pad, Cout_pad) bf16  per-tap weights, taps stacked on rows
    # scale_ref / bias_ref: (1, Cout_pad) f32  folded eval-mode BatchNorm
    # o_ref:  (T_tile, Cout_pad) bf16
    # slab_ref: (T_tile + 32, Cin_pad) f32 scratch holding the gated, halo'd slab
    halo = (K - 1) // 2
    t = pl.program_id(1)
    n_t = pl.num_programs(1)
    cin = x_ref.shape[-1]

    q = q_ref[...]                                           # (1, Cin_pad) f32
    # Gate BEFORE the im2col expansion: one multiply per input element.
    g = x_ref[...].astype(jnp.float32) * q                   # (T_tile, Cin) f32
    lead = xm_ref[pl.ds(_ROWBLK - halo, halo), :].astype(jnp.float32) * q
    trail = xp_ref[pl.ds(0, halo), :].astype(jnp.float32) * q
    lead = jnp.where(t > 0, lead, 0.0)                       # zero halo at t==0
    trail = jnp.where(t < n_t - 1, trail, 0.0)               # zero halo at last t

    # Assemble the halo'd slab in VMEM; the K shifted conv windows are then
    # ref-side pl.ds loads (no value-level relayout of the big tile).
    slab_ref[pl.ds(_ROWBLK, T_tile), :] = g
    slab_ref[pl.ds(_ROWBLK - halo, halo), :] = lead
    slab_ref[pl.ds(_ROWBLK + T_tile, halo), :] = trail

    acc = jnp.dot(slab_ref[pl.ds(_ROWBLK - halo, T_tile), :].astype(jnp.bfloat16),
                  w_ref[pl.ds(0, cin), :],
                  preferred_element_type=jnp.float32)
    for k in range(1, K):
        acc = acc + jnp.dot(
            slab_ref[pl.ds(_ROWBLK - halo + k, T_tile), :].astype(jnp.bfloat16),
            w_ref[pl.ds(k * cin, cin), :],
            preferred_element_type=jnp.float32)

    y = jnp.maximum(acc * scale_ref[...] + bias_ref[...], 0.0)   # BN + ReLU (f32)
    if T_pad > T_real:
        # Zero the padded tail rows so they act as conv zero-padding for the
        # next layer (keeps T padding transparent across the chain).
        row = t * T_tile + jax.lax.broadcasted_iota(jnp.int32, (T_tile, 1), 0)
        y = jnp.where(row < T_real, y, 0.0)
    o_ref[...] = y.astype(o_ref.dtype)


def conv_bn_relu(x, q, w2, scale2, bias2, *, K, T_real, T_tile):
    """x: (B, T_pad, Cin_pad) bf16; q: (B, 1, Cin_pad) f32;
    w2: (K*Cin_pad, Cout_pad) bf16; scale2/bias2: (1, Cout_pad) f32.
    Returns (B, T_pad, Cout_pad) bf16 (channel-padded, channels-last)."""
    B, T_pad, cin_pad = x.shape
    cout_pad = w2.shape[1]
    halo = (K - 1) // 2
    # TODO(synk): only odd 3 <= K <= 33 supported (conv_block default is 3).
    assert K % 2 == 1 and 1 <= halo <= _ROWBLK
    assert T_pad % T_tile == 0 and T_tile % _ROWBLK == 0
    n_t = T_pad // T_tile
    r_blk = T_tile // _ROWBLK
    n_rb = T_pad // _ROWBLK

    kernel = functools.partial(_conv_bn_relu_kernel, K=K, T_tile=T_tile,
                               T_real=T_real, T_pad=T_pad)
    flops = int(2 * B * T_pad * K * cin_pad * cout_pad)
    bytes_accessed = int(2 * B * T_pad * (cin_pad + cout_pad)      # bf16 act i/o
                         + 2 * w2.size
                         + 4 * (q.size + scale2.size + bias2.size))

    return pl.pallas_call(
        kernel,
        out_shape=jax.ShapeDtypeStruct((B, T_pad, cout_pad), jnp.bfloat16),
        grid=(B, n_t),
        in_specs=[
            # Current tile (block index follows t -> VMEM is O(T_tile)).
            pl.BlockSpec((None, T_tile, cin_pad), lambda b, t: (b, t, 0)),
            # Last 16 rows of the previous tile (clamped at t==0; masked in
            # kernel).  Only 16*Cin bytes of extra DMA per tile.
            pl.BlockSpec((None, _ROWBLK, cin_pad),
                         lambda b, t: (b, jnp.maximum(t * r_blk - 1, 0), 0)),
            # First 16 rows of the next tile (clamped at the last tile).
            pl.BlockSpec((None, _ROWBLK, cin_pad),
                         lambda b, t: (b, jnp.minimum((t + 1) * r_blk, n_rb - 1), 0)),
            pl.BlockSpec((None, 1, cin_pad), lambda b, t: (b, 0, 0)),
            # TODO(synk): w/scale/bias are grid-invariant; pipeline_mode=
            # pl.Buffered(1) would drop one buffer copy (negligible here).
            pl.BlockSpec(w2.shape, lambda b, t: (0, 0)),
            pl.BlockSpec(scale2.shape, lambda b, t: (0, 0)),
            pl.BlockSpec(bias2.shape, lambda b, t: (0, 0)),
        ],
        out_specs=pl.BlockSpec((None, T_tile, cout_pad), lambda b, t: (b, t, 0)),
        scratch_shapes=[
            pltpu.VMEM((T_tile + 2 * _ROWBLK, cin_pad), jnp.float32)],
        compiler_params=pltpu.CompilerParams(
            dimension_semantics=("parallel", "parallel")),
        cost_estimate=pl.CostEstimate(flops=flops, transcendentals=0,
                                      bytes_accessed=bytes_accessed),
    )(x, x, x, q, w2, scale2, bias2)


# ----------------------------------------------------------------------------
# Backbone forward (wrapper / glue)
# ----------------------------------------------------------------------------
def backbone_forward(x, query_fts, position_fts, layer_params, max_tile=512):
    """x: (B, Cx, T) NCT f32; query_fts: list of (B, C_l); position_fts: list
    of (B, P, T).  Returns tuple of (B, Cout_l, T) NCT f32 (PyTorch layout)."""
    B, _, T = x.shape
    T_tile, T_pad = _choose_t_tile(T, max_tile)
    cur = jnp.transpose(x, (0, 2, 1))                       # (B, T, C)
    results = []
    for idx, p in enumerate(layer_params):
        q = query_fts[idx].astype(jnp.float32)              # gates the layer input
        if idx == 0:
            pos = jnp.transpose(position_fts[0], (0, 2, 1))  # (B, T, P)
            # cat([q*x, pos]) == cat([q, ones]) * cat([x, pos])
            cur = jnp.concatenate([cur, pos], axis=-1)
            q = jnp.concatenate(
                [q, jnp.ones((B, pos.shape[-1]), jnp.float32)], axis=-1)
            # One-time pad (channels to lane width, T to a tile multiple) and
            # cast to bf16; later layers chain already padded/bf16.
            cur = jnp.pad(cur, ((0, 0), (0, T_pad - T),
                                (0, p["cin_pad"] - cur.shape[-1])))
            cur = cur.astype(jnp.bfloat16)
        elif cur.shape[-1] != p["cin_pad"]:
            # Defensive only: never fires for a standard chained channels_list.
            cur = jnp.pad(cur, ((0, 0), (0, 0),
                                (0, p["cin_pad"] - cur.shape[-1])))

        q_pad = jnp.zeros((B, 1, p["cin_pad"]), jnp.float32)
        q_pad = q_pad.at[:, 0, :q.shape[-1]].set(q)

        cur = conv_bn_relu(cur, q_pad, p["w"], p["scale"], p["bias"],
                           K=p["K"], T_real=T, T_tile=T_tile)  # (B, T_pad, Cout_pad)
        # Module contract: NCT f32 outputs (strip channel / T padding).
        results.append(jnp.transpose(
            cur[:, :T, :p["cout"]].astype(jnp.float32), (0, 2, 1)))
    return tuple(results)


# ----------------------------------------------------------------------------
# Pure-JAX reference (mirrors the PyTorch module, eval-mode BatchNorm)
# ----------------------------------------------------------------------------
def backbone_reference(x, query_fts, position_fts, raw_params, eps=1e-5):
    results = []
    for idx, (w_t, gamma, beta, rmean, rvar) in enumerate(raw_params):
        q = query_fts[idx][:, :, None]                      # (B, C, 1)
        x = q * x
        if idx == 0:
            x = jnp.concatenate([x, position_fts[idx]], axis=1)
        pad = (w_t.shape[2] - 1) // 2
        y = jax.lax.conv_general_dilated(
            x, w_t, window_strides=(1,), padding=[(pad, pad)],
            dimension_numbers=('NCH', 'OIH', 'NCH'))
        y = ((y - rmean[None, :, None]) / jnp.sqrt(rvar[None, :, None] + eps)
             * gamma[None, :, None] + beta[None, :, None])
        x = jnp.maximum(y, 0.0)
        results.append(x)
    return tuple(results)


# ----------------------------------------------------------------------------
# Deterministic parameter construction (raw f32 for reference, folded for kernel)
# ----------------------------------------------------------------------------
def make_params(key, channels_list, eps=1e-5):
    raw, folded = [], []
    for cfg in channels_list:
        cin, cout = cfg[0], cfg[1]
        K = 3  # conv_block default kernel_size
        # TODO(synk): conv_block's stride argument (stride != 1) is not implemented.
        key, k1, k2, k3, k4, k5 = jax.random.split(key, 6)
        w_t = 0.1 * jax.random.normal(k1, (cout, cin, K), jnp.float32)  # OIK
        gamma = 1.0 + 0.1 * jax.random.normal(k2, (cout,), jnp.float32)
        beta = 0.1 * jax.random.normal(k3, (cout,), jnp.float32)
        rmean = 0.1 * jax.random.normal(k4, (cout,), jnp.float32)
        rvar = jax.random.uniform(k5, (cout,), jnp.float32, 0.5, 1.5)
        raw.append((w_t, gamma, beta, rmean, rvar))

        # Eval-mode BatchNorm (running stats) folded into per-channel affine.
        # TODO(synk): training-mode batch statistics are not reproduced here.
        scale = gamma / jnp.sqrt(rvar + eps)
        bias = beta - rmean * scale

        # Lane-dense padding (128) + per-tap weight layout (K*Cin_pad, Cout_pad),
        # stored bf16 for native MXU passes.
        cin_pad = _round_up(cin, _LANE)
        cout_pad = _round_up(cout, _LANE)
        w_kic = jnp.transpose(w_t, (2, 1, 0))               # (K, Cin, Cout)
        w_pad = jnp.zeros((K, cin_pad, cout_pad), jnp.float32)
        w_pad = w_pad.at[:, :cin, :cout].set(w_kic)
        w2 = w_pad.reshape(K * cin_pad, cout_pad).astype(jnp.bfloat16)
        scale2 = jnp.zeros((1, cout_pad), jnp.float32).at[0, :cout].set(scale)
        bias2 = jnp.zeros((1, cout_pad), jnp.float32).at[0, :cout].set(bias)
        folded.append(dict(w=w2, scale=scale2, bias=bias2, K=K,
                           cin=cin, cin_pad=cin_pad,
                           cout=cout, cout_pad=cout_pad))
    return raw, folded


if __name__ == "__main__":
    key = jax.random.PRNGKey(0)

    B, T = 2, 40
    Cx, P = 16, 16                                          # x channels, position channels
    channels_list = [(Cx + P, 32), (32, 64)]                # conv_block(in, out) per layer

    key, kx, kq0, kq1, kp, kparam = jax.random.split(key, 6)
    x = jax.random.normal(kx, (B, Cx, T), jnp.float32)                # NCT
    query_fts = [
        jax.random.normal(kq0, (B, Cx), jnp.float32),                 # gates layer-0 input
        jax.random.normal(kq1, (B, 32), jnp.float32),                 # gates layer-1 input
    ]
    position_fts = [
        jax.random.normal(kp, (B, P, T), jnp.float32),                # used at idx 0
        jnp.zeros((B, 1, T), jnp.float32),                            # fetched, unused
    ]

    raw_params, folded_params = make_params(kparam, channels_list)

    # max_tile=16 (default 512) just to exercise the multi-tile halo exchange
    # and padded-tail mask paths at smoke-test size (T=40 -> 3 tiles, T_pad=48).
    outs = backbone_forward(x, query_fts, position_fts, folded_params,
                            max_tile=16)
    outs = jax.block_until_ready(outs)

    refs = backbone_reference(x, query_fts, position_fts, raw_params)
    for o, r in zip(outs, refs):
        assert o.shape == r.shape, (o.shape, r.shape)
        # bf16 activation/weight chain -> relative-to-max tolerance.
        err = float(jnp.max(jnp.abs(o - r)) / (jnp.max(jnp.abs(r)) + 1e-6))
        assert err < 2e-2, err

    print("KERNEL_OK")
</pallas_src>

<mosaic_0001>
module attributes {stable_mosaic.version = 11 : i64} {
  func.func @_conv_bn_relu_kernel(%arg0: i32, %arg1: i32, %arg2: memref<1x16x128xbf16, #tpu.memory_space<vmem>>, %arg3: memref<1x16x128xbf16, #tpu.memory_space<vmem>>, %arg4: memref<1x16x128xbf16, #tpu.memory_space<vmem>>, %arg5: memref<1x1x128xf32, #tpu.memory_space<vmem>>, %arg6: memref<384x128xbf16, #tpu.memory_space<vmem>>, %arg7: memref<1x128xf32, #tpu.memory_space<vmem>>, %arg8: memref<1x128xf32, #tpu.memory_space<vmem>>, %arg9: memref<1x16x128xbf16, #tpu.memory_space<vmem>>, %arg10: memref<48x128xf32, #tpu.memory_space<vmem>>) attributes {dimension_semantics = [#tpu.dimension_semantics<parallel>, #tpu.dimension_semantics<parallel>], iteration_bounds = array<i64: 2, 3>, scalar_prefetch = 0 : i64, scratch_operands = 1 : i64, tpu.core_type = #tpu.core_type<tc>, window_params = [{transform_indices = @transform_0, window_bounds = array<i64: 1, 16, 128>}, {transform_indices = @transform_1, window_bounds = array<i64: 1, 16, 128>}, {transform_indices = @transform_2, window_bounds = array<i64: 1, 16, 128>}, {transform_indices = @transform_3, window_bounds = array<i64: 1, 1, 128>}, {pipeline_mode = #tpu.pipeline_mode<synchronous>, transform_indices = @transform_4, window_bounds = array<i64: 384, 128>}, {pipeline_mode = #tpu.pipeline_mode<synchronous>, transform_indices = @transform_5, window_bounds = array<i64: 1, 128>}, {pipeline_mode = #tpu.pipeline_mode<synchronous>, transform_indices = @transform_6, window_bounds = array<i64: 1, 128>}, {transform_indices = @transform_7, window_bounds = array<i64: 1, 16, 128>}]} {
    %c0 = arith.constant 0 : index
    %c0_0 = arith.constant 0 : index
    %c0_1 = arith.constant 0 : index
    %0 = vector.load %arg5[%c0, %c0_0, %c0_1] : memref<1x1x128xf32, #tpu.memory_space<vmem>>, vector<1x1x128xf32>
    %1 = vector.shape_cast %0 : vector<1x1x128xf32> to vector<1x128xf32>
    %c0_2 = arith.constant 0 : index
    %c0_3 = arith.constant 0 : index
    %c0_4 = arith.constant 0 : index
    %2 = vector.load %arg2[%c0_2, %c0_3, %c0_4] : memref<1x16x128xbf16, #tpu.memory_space<vmem>>, vector<1x16x128xbf16>
    %3 = vector.shape_cast %2 : vector<1x16x128xbf16> to vector<16x128xbf16>
    %4 = arith.extf %3 : vector<16x128xbf16> to vector<16x128xf32>
    %5 = vector.broadcast %1 : vector<1x128xf32> to vector<16x128xf32>
    %6 = arith.mulf %4, %5 : vector<16x128xf32>
    %c0_5 = arith.constant 0 : index
    %c15 = arith.constant 15 : index
    %c0_6 = arith.constant 0 : index
    %7 = vector.load %arg3[%c0_5, %c15, %c0_6] : memref<1x16x128xbf16, #tpu.memory_space<vmem>>, vector<1x1x128xbf16>
    %8 = vector.shape_cast %7 : vector<1x1x128xbf16> to vector<1x128xbf16>
    %9 = arith.extf %8 : vector<1x128xbf16> to vector<1x128xf32>
    %10 = arith.mulf %9, %1 : vector<1x128xf32>
    %c0_7 = arith.constant 0 : index
    %c0_8 = arith.constant 0 : index
    %c0_9 = arith.constant 0 : index
    %11 = vector.load %arg4[%c0_7, %c0_8, %c0_9] : memref<1x16x128xbf16, #tpu.memory_space<vmem>>, vector<1x1x128xbf16>
    %12 = vector.shape_cast %11 : vector<1x1x128xbf16> to vector<1x128xbf16>
    %13 = arith.extf %12 : vector<1x128xbf16> to vector<1x128xf32>
    %14 = arith.mulf %13, %1 : vector<1x128xf32>
    %c0_i32 = arith.constant 0 : i32
    %15 = arith.cmpi sgt, %arg1, %c0_i32 : i32
    %cst = arith.constant 0.000000e+00 : f32
    %16 = vector.broadcast %cst : f32 to vector<1x128xf32>
    %17 = arith.select %15, %10, %16 : vector<1x128xf32>
    %c2_i32 = arith.constant 2 : i32
    %18 = arith.cmpi slt, %arg1, %c2_i32 : i32
    %cst_10 = arith.constant 0.000000e+00 : f32
    %19 = vector.broadcast %cst_10 : f32 to vector<1x128xf32>
    %20 = arith.select %18, %14, %19 : vector<1x128xf32>
    %c16 = arith.constant 16 : index
    %c0_11 = arith.constant 0 : index
    %21 = vector.load %arg10[%c16, %c0_11] : memref<48x128xf32, #tpu.memory_space<vmem>>, vector<16x128xf32>
    tpu.vector_store %arg10[%c16, %c0_11], %6 {strides = array<i32>} : memref<48x128xf32, #tpu.memory_space<vmem>>, vector<16x128xf32>,
    %c15_12 = arith.constant 15 : index
    %c0_13 = arith.constant 0 : index
    %22 = vector.load %arg10[%c15_12, %c0_13] : memref<48x128xf32, #tpu.memory_space<vmem>>, vector<1x128xf32>
    tpu.vector_store %arg10[%c15_12, %c0_13], %17 {strides = array<i32>} : memref<48x128xf32, #tpu.memory_space<vmem>>, vector<1x128xf32>,
    %c32 = arith.constant 32 : index
    %c0_14 = arith.constant 0 : index
    %23 = vector.load %arg10[%c32, %c0_14] : memref<48x128xf32, #tpu.memory_space<vmem>>, vector<1x128xf32>
    tpu.vector_store %arg10[%c32, %c0_14], %20 {strides = array<i32>} : memref<48x128xf32, #tpu.memory_space<vmem>>, vector<1x128xf32>,
    %c15_15 = arith.constant 15 : index
    %c0_16 = arith.constant 0 : index
    %24 = vector.load %arg10[%c15_15, %c0_16] : memref<48x128xf32, #tpu.memory_space<vmem>>, vector<16x128xf32>
    %25 = arith.truncf %24 : vector<16x128xf32> to vector<16x128xbf16>
    %c0_17 = arith.constant 0 : index
    %c0_18 = arith.constant 0 : index
    %26 = vector.load %arg6[%c0_17, %c0_18] : memref<384x128xbf16, #tpu.memory_space<vmem>>, vector<128x128xbf16>
    %cst_19 = arith.constant dense<0.000000e+00> : vector<16x128xf32>
    %27 = tpu.matmul %25, %26, %cst_19 {dimension_numbers = #tpu.dot_dimension_numbers<[1], [0], [0], [1], [0, 0, 1, 1], [], []>} : vector<16x128xbf16>, vector<128x128xbf16>, vector<16x128xf32> -> vector<16x128xf32>
    %c16_20 = arith.constant 16 : index
    %c0_21 = arith.constant 0 : index
    %28 = vector.load %arg10[%c16_20, %c0_21] : memref<48x128xf32, #tpu.memory_space<vmem>>, vector<16x128xf32>
    %29 = arith.truncf %28 : vector<16x128xf32> to vector<16x128xbf16>
    %c128 = arith.constant 128 : index
    %c0_22 = arith.constant 0 : index
    %30 = vector.load %arg6[%c128, %c0_22] : memref<384x128xbf16, #tpu.memory_space<vmem>>, vector<128x128xbf16>
    %cst_23 = arith.constant dense<0.000000e+00> : vector<16x128xf32>
    %31 = tpu.matmul %29, %30, %cst_23 {dimension_numbers = #tpu.dot_dimension_numbers<[1], [0], [0], [1], [0, 0, 1, 1], [], []>} : vector<16x128xbf16>, vector<128x128xbf16>, vector<16x128xf32> -> vector<16x128xf32>
    %32 = arith.addf %27, %31 : vector<16x128xf32>
    %c17 = arith.constant 17 : index
    %c0_24 = arith.constant 0 : index
    %33 = vector.load %arg10[%c17, %c0_24] : memref<48x128xf32, #tpu.memory_space<vmem>>, vector<16x128xf32>
    %34 = arith.truncf %33 : vector<16x128xf32> to vector<16x128xbf16>
    %c256 = arith.constant 256 : index
    %c0_25 = arith.constant 0 : index
    %35 = vector.load %arg6[%c256, %c0_25] : memref<384x128xbf16, #tpu.memory_space<vmem>>, vector<128x128xbf16>
    %cst_26 = arith.constant dense<0.000000e+00> : vector<16x128xf32>
    %36 = tpu.matmul %34, %35, %cst_26 {dimension_numbers = #tpu.dot_dimension_numbers<[1], [0], [0], [1], [0, 0, 1, 1], [], []>} : vector<16x128xbf16>, vector<128x128xbf16>, vector<16x128xf32> -> vector<16x128xf32>
    %37 = arith.addf %32, %36 : vector<16x128xf32>
    %c0_27 = arith.constant 0 : index
    %c0_28 = arith.constant 0 : index
    %38 = vector.load %arg7[%c0_27, %c0_28] : memref<1x128xf32, #tpu.memory_space<vmem>>, vector<1x128xf32>
    %39 = vector.broadcast %38 : vector<1x128xf32> to vector<16x128xf32>
    %40 = arith.mulf %37, %39 : vector<16x128xf32>
    %c0_29 = arith.constant 0 : index
    %c0_30 = arith.constant 0 : index
    %41 = vector.load %arg8[%c0_29, %c0_30] : memref<1x128xf32, #tpu.memory_space<vmem>>, vector<1x128xf32>
    %42 = vector.broadcast %41 : vector<1x128xf32> to vector<16x128xf32>
    %43 = arith.addf %40, %42 : vector<16x128xf32>
    %cst_31 = arith.constant 0.000000e+00 : f32
    %44 = vector.broadcast %cst_31 : f32 to vector<16x128xf32>
    %45 = arith.maximumf %43, %44 : vector<16x128xf32>
    %c16_i32 = arith.constant 16 : i32
    %46 = arith.muli %arg1, %c16_i32 : i32
    %47 = tpu.iota {dimensions = array<i32: 0>} : vector<16x1xi32>
    %48 = vector.broadcast %46 : i32 to vector<16x1xi32>
    %49 = arith.addi %48, %47 : vector<16x1xi32>
    %c40_i32 = arith.constant 40 : i32
    %50 = vector.broadcast %c40_i32 : i32 to vector<16x1xi32>
    %51 = arith.cmpi slt, %49, %50 : vector<16x1xi32>
    %cst_32 = arith.constant 0.000000e+00 : f32
    %52 = vector.shape_cast %51 : vector<16x1xi1> to vector<16x1xi1>
    %53 = vector.broadcast %52 : vector<16x1xi1> to vector<16x128xi1>
    %54 = vector.broadcast %cst_32 : f32 to vector<16x128xf32>
    %55 = arith.select %53, %45, %54 : vector<16x128xi1>, vector<16x128xf32>
    %56 = arith.truncf %55 : vector<16x128xf32> to vector<16x128xbf16>
    %c0_33 = arith.constant 0 : index
    %c0_34 = arith.constant 0 : index
    %c0_35 = arith.constant 0 : index
    %57 = vector.load %arg9[%c0_33, %c0_34, %c0_35] : memref<1x16x128xbf16, #tpu.memory_space<vmem>>, vector<1x16x128xbf16>
    %58 = vector.shape_cast %57 : vector<1x16x128xbf16> to vector<16x128xbf16>
    %59 = vector.shape_cast %56 : vector<16x128xbf16> to vector<1x16x128xbf16>
    tpu.vector_store %arg9[%c0_33, %c0_34, %c0_35], %59 {strides = array<i32>} : memref<1x16x128xbf16, #tpu.memory_space<vmem>>, vector<1x16x128xbf16>,
    return
  }
  func.func @transform_0(%arg0: i32, %arg1: i32) -> (i32, i32, i32) {
    %c0_i32 = arith.constant 0 : i32
    %c0_i32_0 = arith.constant 0 : i32
    return %arg0, %arg1, %c0_i32 : i32, i32, i32
  }
  func.func @transform_1(%arg0: i32, %arg1: i32) -> (i32, i32, i32) {
    %c1_i32 = arith.constant 1 : i32
    %0 = arith.muli %arg1, %c1_i32 : i32
    %c1_i32_0 = arith.constant 1 : i32
    %1 = arith.subi %0, %c1_i32_0 : i32
    %c0_i32 = arith.constant 0 : i32
    %2 = arith.maxsi %1, %c0_i32 : i32
    %c0_i32_1 = arith.constant 0 : i32
    %c0_i32_2 = arith.constant 0 : i32
    return %arg0, %2, %c0_i32_1 : i32, i32, i32
  }
  func.func @transform_2(%arg0: i32, %arg1: i32) -> (i32, i32, i32) {
    %c1_i32 = arith.constant 1 : i32
    %0 = arith.addi %arg1, %c1_i32 : i32
    %c1_i32_0 = arith.constant 1 : i32
    %1 = arith.muli %0, %c1_i32_0 : i32
    %c2_i32 = arith.constant 2 : i32
    %2 = arith.minsi %1, %c2_i32 : i32
    %c0_i32 = arith.constant 0 : i32
    %c0_i32_1 = arith.constant 0 : i32
    return %arg0, %2, %c0_i32 : i32, i32, i32
  }
  func.func @transform_3(%arg0: i32, %arg1: i32) -> (i32, i32, i32) {
    %c0_i32 = arith.constant 0 : i32
    %c0_i32_0 = arith.constant 0 : i32
    %c0_i32_1 = arith.constant 0 : i32
    return %arg0, %c0_i32, %c0_i32_0 : i32, i32, i32
  }
  func.func @transform_4(%arg0: i32, %arg1: i32) -> (i32, i32) {
    %c0_i32 = arith.constant 0 : i32
    %c0_i32_0 = arith.constant 0 : i32
    %c0_i32_1 = arith.constant 0 : i32
    return %c0_i32, %c0_i32_0 : i32, i32
  }
  func.func @transform_5(%arg0: i32, %arg1: i32) -> (i32, i32) {
    %c0_i32 = arith.constant 0 : i32
    %c0_i32_0 = arith.constant 0 : i32
    %c0_i32_1 = arith.constant 0 : i32
    return %c0_i32, %c0_i32_0 : i32, i32
  }
  func.func @transform_6(%arg0: i32, %arg1: i32) -> (i32, i32) {
    %c0_i32 = arith.constant 0 : i32
    %c0_i32_0 = arith.constant 0 : i32
    %c0_i32_1 = arith.constant 0 : i32
    return %c0_i32, %c0_i32_0 : i32, i32
  }
  func.func @transform_7(%arg0: i32, %arg1: i32) -> (i32, i32, i32) {
    %c0_i32 = arith.constant 0 : i32
    %c0_i32_0 = arith.constant 0 : i32
    return %arg0, %arg1, %c0_i32 : i32, i32, i32
  }
}

</mosaic_0001>

<llo_original>
// kernel: tpu_custom_call.1
$region0: #{tpu_custom_call.1}
  #allocation0 [shape = 'u32[]', space=smem, size = 0x4, offset = 0x4, fixed_abs, tag = 'smem constant byte address 0x4 - core index']
  #allocation1 [shape = 'u32[144,128]{1,0:T(1,128)}', space=vmem, size = 0x12000, scoped, tag = 'internal scratch']
  #allocation2 [shape = 'f32[48,128]{1,0:T(8,128)}', space=vmem, size = 0x6000, scoped, tag = 'scratch operand']
  %s0 = inlined_call_operand.hbm [shape: bf16[2,48,128], index: 0, kind: input, shape index: {}]
  %s1 = inlined_call_operand.hbm [shape: bf16[2,48,128], index: 1, kind: input, shape index: {}]
  %s2 = inlined_call_operand.hbm [shape: bf16[2,48,128], index: 2, kind: input, shape index: {}]
  %s3 = inlined_call_operand.vmem [shape: f32[2,1,128], index: 3, kind: input, shape index: {}]
  %s4 = inlined_call_operand.hbm [shape: bf16[384,128], index: 4, kind: input, shape index: {}]
  %s5 = inlined_call_operand.vmem [shape: f32[1,128], index: 5, kind: input, shape index: {}]
  %s6 = inlined_call_operand.vmem [shape: f32[1,128], index: 6, kind: input, shape index: {}]
  %s7 = inlined_call_operand.hbm [shape: bf16[2,48,128], index: 7, kind: output, shape index: {}]
  %s8 = sld [smem:[#allocation0]]
  $region77: #{tpu_custom_call.1} parent=0
    _
  %s10 = ssub.s32 1, %s8
  %s11 = scalar_select 0, %s10, %s8
  $region1: #{tpu_custom_call.1} parent=0
    #allocation3 [shape = 'u8[8192]{0}', space=vmem, size = 0x2000, scoped, tag = 'input window, operand 0']
    #allocation4 [shape = 's32[2]{0}', space=sflag, size = 0x8, scoped, tag = 'scoped memory for tpu_custom_call.1']
    #allocation5 [shape = 's32[2]{0}', space=sflag, size = 0x8, scoped, tag = 'scoped memory for tpu_custom_call.1']
    #allocation6 [shape = 'u8[8192]{0}', space=vmem, size = 0x2000, scoped, tag = 'input window, operand 1']
    #allocation7 [shape = 's32[2]{0}', space=sflag, size = 0x8, scoped, tag = 'scoped memory for tpu_custom_call.1']
    #allocation8 [shape = 'u8[8192]{0}', space=vmem, size = 0x2000, scoped, tag = 'input window, operand 2']
    #allocation9 [shape = 'u8[98304]{0}', space=vmem, size = 0x18000, scoped, tag = 'input window, operand 4, single buffered']
    #allocation10 [shape = 's32[1]{0}', space=sflag, size = 0x4, scoped, tag = 'scoped memory for tpu_custom_call.1']
    #allocation11 [shape = 'u8[8192]{0}', space=vmem, size = 0x2000, scoped, tag = 'output window, operand 0']
    %12 = vsyncpa [#allocation4], 0
    %s13 = scalar_lea.sflag [#allocation4], 1
    %14 = vsyncpa %s13, 0
    %15 = vsyncpa [#allocation7], 0
    %s16 = scalar_lea.sflag [#allocation7], 1
    %17 = vsyncpa %s16, 0
    %18 = vsyncpa [#allocation10], 0
    %19 = vsyncpa [#allocation5], 0
    %s20 = scalar_lea.sflag [#allocation5], 1
    %21 = vsyncpa %s20, 0
    loop: start=0, step=1, limit=8
    $region2: #{tpu_custom_call.1} parent=1 // loop_pre_header
      _
    $region3: #{tpu_custom_call.1} parent=1 // loop_header
      %s23 = sphi 0, %s27
      %p24 = scmp.ge.s32.totalorder %s23, 8
      %s30 = sphi 0, %s42
      %s31 = sphi 0, %s38
      %s32 = sphi 0, %s30
      %s33 = sphi 0, %s31
      %s34 = sphi 0, %s32
      %s35 = sphi 0, %s33
      %s47 = sphi 0, %s49
      %s50 = sphi 0, %s47
      %s51 = sphi 0, %s50
      %s67 = sphi 0, %s51
      %s81 = sphi 0, %s83
      %s84 = sphi 0, %s81
      %s85 = sphi 0, %s84
      %s101 = sphi 0, %s85
      %s115 = sphi 0, %s117
      %s118 = sphi 0, %s115
      %s119 = sphi 0, %s118
      %s135 = sphi 0, %s119
      %s141 = sphi 0, %s143
      %s144 = sphi 0, %s141
      %s145 = sphi 0, %s144
      %s161 = sphi 0, %s145
      %s165 = sphi 0, %s165
      %s167 = sphi 0, %s165
      %s168 = sphi 0, %s167
      %s182 = sphi 0, %s168
      %s186 = sphi 0, %s186
      %s188 = sphi 0, %s186
      %s189 = sphi 0, %s188
      %s203 = sphi 0, %s189
      %s207 = sphi 0, %s207
      %s209 = sphi 0, %s207
      %s210 = sphi 0, %s209
      %s224 = sphi 0, %s210
      %s232 = sphi 0, %s234
      %s235 = sphi 0, %s232
      %s236 = sphi 0, %s235
      %s252 = sphi 0, %s236
    $region4: #{tpu_custom_call.1} parent=1 // loop_header_branch
      %26 = sbr.rel (%p24) target = $region8
    $region5: #{tpu_custom_call.1} parent=1 // loop_body
      %s28 = ssub.s32 %s23, 1
      %s29 = ssub.s32 %s23, 2
      %s36 = sadd.s32 1, %s31
      %p37 = scmp.ge.s32.totalorder %s36, 3
      %s38 = scalar_select %p37, 0, %s36
      %s39 = sadd.s32 1, %s30
      %s40 = scalar_select %p37, %s39, %s30
      %p41 = scmp.ge.s32.totalorder %s40, 2
      %s42 = scalar_select %p41, 0, %s40
      %s43 = ssub.s32 %s30, %s42
      %s44 = ssub.s32 %s31, %s38
      %s45 = sor.u32 %s43, %s44
      %p46 = scmp.eq.s32.totalorder %s45, 0
      %s48 = sadd.s32 %s47, 1
      %s49 = scalar_select %p46, %s47, %s48
      %p52 = pneg %p46
      %p53 = scmp.eq.s32.totalorder %s23, 5
      %p54 = por %p52, %p53
      %p55 = scmp.ne.s32.totalorder %s47, %s50
      %p56 = scmp.eq.s32.totalorder %s23, 0
      %p57 = por %p55, %p56
      %p58 = scmp.ne.s32.totalorder %s47, %s50
      %p59 = scmp.eq.s32.totalorder %s28, 5
      %p60 = por %p58, %p59
      %p61 = scmp.ne.s32.totalorder %s50, %s51
      %p62 = scmp.eq.s32.totalorder %s28, 0
      %p63 = por %p61, %p62
      %p64 = scmp.ne.s32.totalorder %s50, %s51
      %p65 = scmp.eq.s32.totalorder %s29, 5
      %p66 = por %p64, %p65
      %p68 = scmp.ne.s32.totalorder %s51, %s67
      %p69 = scmp.eq.s32.totalorder %s29, 0
      %p70 = por %p68, %p69
      %s71 = ssub.s32 %s31, 1
      %p72 = scmp.gt.s32.totalorder %s71, 0
      %s73 = scalar_select %p72, %s71, 0
      %s74 = ssub.s32 %s38, 1
      %p75 = scmp.gt.s32.totalorder %s74, 0
      %s76 = scalar_select %p75, %s74, 0
      %s77 = ssub.s32 %s30, %s42
      %s78 = ssub.s32 %s73, %s76
      %s79 = sor.u32 %s77, %s78
      %p80 = scmp.eq.s32.totalorder %s79, 0
      %s82 = sadd.s32 %s81, 1
      %s83 = scalar_select %p80, %s81, %s82
      %p86 = pneg %p80
      %p87 = scmp.eq.s32.totalorder %s23, 5
      %p88 = por %p86, %p87
      %p89 = scmp.ne.s32.totalorder %s81, %s84
      %p90 = scmp.eq.s32.totalorder %s23, 0
      %p91 = por %p89, %p90
      %p92 = scmp.ne.s32.totalorder %s81, %s84
      %p93 = scmp.eq.s32.totalorder %s28, 5
      %p94 = por %p92, %p93
      %p95 = scmp.ne.s32.totalorder %s84, %s85
      %p96 = scmp.eq.s32.totalorder %s28, 0
      %p97 = por %p95, %p96
      %p98 = scmp.ne.s32.totalorder %s84, %s85
      %p99 = scmp.eq.s32.totalorder %s29, 5
      %p100 = por %p98, %p99
      %p102 = scmp.ne.s32.totalorder %s85, %s101
      %p103 = scmp.eq.s32.totalorder %s29, 0
      %p104 = por %p102, %p103
      %s105 = sadd.s32 %s31, 1
      %p106 = scmp.lt.s32.totalorder %s105, 2
      %s107 = scalar_select %p106, %s105, 2
      %s108 = sadd.s32 %s38, 1
      %p109 = scmp.lt.s32.totalorder %s108, 2
      %s110 = scalar_select %p109, %s108, 2
      %s111 = ssub.s32 %s30, %s42
      %s112 = ssub.s32 %s107, %s110
      %s113 = sor.u32 %s111, %s112
      %p114 = scmp.eq.s32.totalorder %s113, 0
      %s116 = sadd.s32 %s115, 1
      %s117 = scalar_select %p114, %s115, %s116
      %p120 = pneg %p114
      %p121 = scmp.eq.s32.totalorder %s23, 5
      %p122 = por %p120, %p121
      %p123 = scmp.ne.s32.totalorder %s115, %s118
      %p124 = scmp.eq.s32.totalorder %s23, 0
      %p125 = por %p123, %p124
      %p126 = scmp.ne.s32.totalorder %s115, %s118
      %p127 = scmp.eq.s32.totalorder %s28, 5
      %p128 = por %p126, %p127
      %p129 = scmp.ne.s32.totalorder %s118, %s119
      %p130 = scmp.eq.s32.totalorder %s28, 0
      %p131 = por %p129, %p130
      %p132 = scmp.ne.s32.totalorder %s118, %s119
      %p133 = scmp.eq.s32.totalorder %s29, 5
      %p134 = por %p132, %p133
      %p136 = scmp.ne.s32.totalorder %s119, %s135
      %p137 = scmp.eq.s32.totalorder %s29, 0
      %p138 = por %p136, %p137
      %s139 = ssub.s32 %s30, %s42
      %p140 = scmp.eq.s32.totalorder %s139, 0
      %s142 = sadd.s32 %s141, 1
      %s143 = scalar_select %p140, %s141, %s142
      %p146 = pneg %p140
      %p147 = scmp.eq.s32.totalorder %s23, 5
      %p148 = por %p146, %p147
      %p149 = scmp.ne.s32.totalorder %s141, %s144
      %p150 = scmp.eq.s32.totalorder %s23, 0
      %p151 = por %p149, %p150
      %p152 = scmp.ne.s32.totalorder %s141, %s144
      %p153 = scmp.eq.s32.totalorder %s28, 5
      %p154 = por %p152, %p153
      %p155 = scmp.ne.s32.totalorder %s144, %s145
      %p156 = scmp.eq.s32.totalorder %s28, 0
      %p157 = por %p155, %p156
      %p158 = scmp.ne.s32.totalorder %s144, %s145
      %p159 = scmp.eq.s32.totalorder %s29, 5
      %p160 = por %p158, %p159
      %p162 = scmp.ne.s32.totalorder %s145, %s161
      %p163 = scmp.eq.s32.totalorder %s29, 0
      %p164 = por %p162, %p163
      %s166 = sadd.s32 %s165, 1
      %p169 = scmp.eq.s32.totalorder %s23, 5
      %p170 = scmp.ne.s32.totalorder %s165, %s167
      %p171 = scmp.eq.s32.totalorder %s23, 0
      %p172 = por %p170, %p171
      %p173 = scmp.ne.s32.totalorder %s165, %s167
      %p174 = scmp.eq.s32.totalorder %s28, 5
      %p175 = por %p173, %p174
      %p176 = scmp.ne.s32.totalorder %s167, %s168
      %p177 = scmp.eq.s32.totalorder %s28, 0
      %p178 = por %p176, %p177
      %p179 = scmp.ne.s32.totalorder %s167, %s168
      %p180 = scmp.eq.s32.totalorder %s29, 5
      %p181 = por %p179, %p180
      %p183 = scmp.ne.s32.totalorder %s168, %s182
      %p184 = scmp.eq.s32.totalorder %s29, 0
      %p185 = por %p183, %p184
      %s187 = sadd.s32 %s186, 1
      %p190 = scmp.eq.s32.totalorder %s23, 5
      %p191 = scmp.ne.s32.totalorder %s186, %s188
      %p192 = scmp.eq.s32.totalorder %s23, 0
      %p193 = por %p191, %p192
      %p194 = scmp.ne.s32.totalorder %s186, %s188
      %p195 = scmp.eq.s32.totalorder %s28, 5
      %p196 = por %p194, %p195
      %p197 = scmp.ne.s32.totalorder %s188, %s189
      %p198 = scmp.eq.s32.totalorder %s28, 0
      %p199 = por %p197, %p198
      %p200 = scmp.ne.s32.totalorder %s188, %s189
      %p201 = scmp.eq.s32.totalorder %s29, 5
      %p202 = por %p200, %p201
      %p204 = scmp.ne.s32.totalorder %s189, %s203
      %p205 = scmp.eq.s32.totalorder %s29, 0
      %p206 = por %p204, %p205
      %s208 = sadd.s32 %s207, 1
      %p211 = scmp.eq.s32.totalorder %s23, 5
      %p212 = scmp.ne.s32.totalorder %s207, %s209
      %p213 = scmp.eq.s32.totalorder %s23, 0
      %p214 = por %p212, %p213
      %p215 = scmp.ne.s32.totalorder %s207, %s209
      %p216 = scmp.eq.s32.totalorder %s28, 5
      %p217 = por %p215, %p216
      %p218 = scmp.ne.s32.totalorder %s209, %s210
      %p219 = scmp.eq.s32.totalorder %s28, 0
      %p220 = por %p218, %p219
      %p221 = scmp.ne.s32.totalorder %s209, %s210
      %p222 = scmp.eq.s32.totalorder %s29, 5
      %p223 = por %p221, %p222
      %p225 = scmp.ne.s32.totalorder %s210, %s224
      %p226 = scmp.eq.s32.totalorder %s29, 0
      %p227 = por %p225, %p226
      %s228 = ssub.s32 %s30, %s42
      %s229 = ssub.s32 %s31, %s38
      %s230 = sor.u32 %s228, %s229
      %p231 = scmp.eq.s32.totalorder %s230, 0
      %s233 = sadd.s32 %s232, 1
      %s234 = scalar_select %p231, %s232, %s233
      %p237 = pneg %p231
      %p238 = scmp.eq.s32.totalorder %s23, 5
      %p239 = por %p237, %p238
      %p240 = scmp.ne.s32.totalorder %s232, %s235
      %p241 = scmp.eq.s32.totalorder %s23, 0
      %p242 = por %p240, %p241
      %p243 = scmp.ne.s32.totalorder %s232, %s235
      %p244 = scmp.eq.s32.totalorder %s28, 5
      %p245 = por %p243, %p244
      %p246 = scmp.ne.s32.totalorder %s235, %s236
      %p247 = scmp.eq.s32.totalorder %s28, 0
      %p248 = por %p246, %p247
      %p249 = scmp.ne.s32.totalorder %s235, %s236
      %p250 = scmp.eq.s32.totalorder %s29, 5
      %p251 = por %p249, %p250
      %p253 = scmp.ne.s32.totalorder %s236, %s252
      %p254 = scmp.eq.s32.totalorder %s29, 0
      %p255 = por %p253, %p254
      %p256 = scmp.le.s32.totalorder 1, %s23
      %p257 = scmp.lt.s32.totalorder %s23, 7
      %p258 = pnand %p256, %p257
      %p259 = pneg %p258
      // Predicated region
      $region9: #{tpu_custom_call.1} parent=5 // pred_check
        _
      $region10: #{tpu_custom_call.1} parent=5 // pred_check_branch
        %261 = sbr.rel (%p258) target = $region12
      $region11: #{tpu_custom_call.1} parent=5 // pred_region
        %s262 = ssub.s32 %s23, 1
        // Predicated region
        $region13: #{tpu_custom_call.1} parent=11 // pred_check
          %p263 = pneg %p178
        $region14: #{tpu_custom_call.1} parent=11 // pred_check_branch
          %265 = sbr.rel (%p263) target = $region16
        $region15: #{tpu_custom_call.1} parent=11 // pred_region
          %s267 = ssub.s32 3072, 3072
          %268 = vsyncadd [#allocation10], %s267
          %s269 = sshll.u32 [#allocation9], 4
          %s270 = int_to_ptr.vmem [resolvable:$true] %s269
          %275 = dma.hbm_to_vmem [thread:$0]  %s4, 3072, %s270, [#allocation10], 64, 64, 4
        $region16: #{tpu_custom_call.1} parent=11 // pred_fallthru
          _
        // Predicated region
        $region17: #{tpu_custom_call.1} parent=11 // pred_check
          %p276 = pneg %p199
        $region18: #{tpu_custom_call.1} parent=11 // pred_check_branch
          %278 = sbr.rel (%p276) target = $region20
        $region19: #{tpu_custom_call.1} parent=11 // pred_region
          _
        $region20: #{tpu_custom_call.1} parent=11 // pred_fallthru
          _
        // Predicated region
        $region21: #{tpu_custom_call.1} parent=11 // pred_check
          %p279 = pneg %p220
        $region22: #{tpu_custom_call.1} parent=11 // pred_check_branch
          %281 = sbr.rel (%p279) target = $region24
        $region23: #{tpu_custom_call.1} parent=11 // pred_region
          _
        $region24: #{tpu_custom_call.1} parent=11 // pred_fallthru
          _
      $region12: #{tpu_custom_call.1} parent=5 // pred_fallthru
        _
      %p282 = scmp.lt.s32.totalorder %s23, 6
      // Predicated region
      $region25: #{tpu_custom_call.1} parent=5 // pred_check
        %p283 = pneg %p282
      $region26: #{tpu_custom_call.1} parent=5 // pred_check_branch
        %285 = sbr.rel (%p283) target = $region28
      $region27: #{tpu_custom_call.1} parent=5 // pred_region
        // Predicated region
        $region29: #{tpu_custom_call.1} parent=27 // pred_check
          %p286 = pneg %p57
        $region30: #{tpu_custom_call.1} parent=27 // pred_check_branch
          %288 = sbr.rel (%p286) target = $region32
        $region31: #{tpu_custom_call.1} parent=27 // pred_region
          %s289 = sand.u32 %s47, 1
          %s290 = scalar_lea.sflag [#allocation4], %s289
          %s291 = sand.u32 %s47, 1
          %s292 = smul.addr %s291, 8
          %s293 = scalar_lea.vmem [#allocation3], %s292
          %s294 = smul.u32 2, %s31
          %s296 = ssub.s32 128, 128
          %297 = vsyncadd %s290, %s296
          %s298 = smul.addr %s30, 6
          %s299 = sadd.s32 %s294, %s298
          %s300 = smul.addr %s299, 64
          %s301 = scalar_lea.hbm %s0, %s300
          %s302 = sshll.u32 %s293, 4
          %s303 = int_to_ptr.vmem [resolvable:$true] %s302
          %308 = dma.hbm_to_vmem [thread:$0]  %s301, 128, %s303, %s290, 64, 64, 4
        $region32: #{tpu_custom_call.1} parent=27 // pred_fallthru
          _
        // Predicated region
        $region33: #{tpu_custom_call.1} parent=27 // pred_check
          %p309 = pneg %p91
        $region34: #{tpu_custom_call.1} parent=27 // pred_check_branch
          %311 = sbr.rel (%p309) target = $region36
        $region35: #{tpu_custom_call.1} parent=27 // pred_region
          %s312 = sand.u32 %s23, 1
          %s313 = scalar_lea.sflag [#allocation7], %s312
          %s314 = sand.u32 %s81, 1
          %s315 = smul.addr %s314, 8
          %s316 = scalar_lea.vmem [#allocation6], %s315
          %s317 = ssub.s32 %s31, 1
          %p318 = scmp.gt.s32.totalorder %s317, 0
          %s319 = scalar_select %p318, %s317, 0
          %s320 = smul.u32 2, %s319
          %s322 = ssub.s32 128, 128
          %323 = vsyncadd %s313, %s322
          %s324 = smul.addr %s30, 6
          %s325 = sadd.s32 %s320, %s324
          %s326 = smul.addr %s325, 64
          %s327 = scalar_lea.hbm %s1, %s326
          %s328 = sshll.u32 %s316, 4
          %s329 = int_to_ptr.vmem [resolvable:$true] %s328
          %334 = dma.hbm_to_vmem [thread:$0]  %s327, 128, %s329, %s313, 64, 64, 4
        $region36: #{tpu_custom_call.1} parent=27 // pred_fallthru
          _
        // Predicated region
        $region37: #{tpu_custom_call.1} parent=27 // pred_check
          %p335 = pneg %p125
        $region38: #{tpu_custom_call.1} parent=27 // pred_check_branch
          %337 = sbr.rel (%p335) target = $region40
        $region39: #{tpu_custom_call.1} parent=27 // pred_region
          %s338 = sand.u32 %s23, 1
          %s339 = scalar_lea.sflag [#allocation7], %s338
          %s340 = sand.u32 %s115, 1
          %s341 = smul.addr %s340, 8
          %s342 = scalar_lea.vmem [#allocation8], %s341
          %s343 = sadd.s32 %s31, 1
          %p344 = scmp.lt.s32.totalorder %s343, 2
          %s345 = scalar_select %p344, %s343, 2
          %s346 = smul.u32 2, %s345
          %s348 = ssub.s32 128, 128
          %349 = vsyncadd %s339, %s348
          %s350 = smul.addr %s30, 6
          %s351 = sadd.s32 %s346, %s350
          %s352 = smul.addr %s351, 64
          %s353 = scalar_lea.hbm %s2, %s352
          %s354 = sshll.u32 %s342, 4
          %s355 = int_to_ptr.vmem [resolvable:$true] %s354
          %360 = dma.hbm_to_vmem [thread:$0]  %s353, 128, %s355, %s339, 64, 64, 4
        $region40: #{tpu_custom_call.1} parent=27 // pred_fallthru
          _
        // Predicated region
        $region41: #{tpu_custom_call.1} parent=27 // pred_check
          %p361 = pneg %p151
        $region42: #{tpu_custom_call.1} parent=27 // pred_check_branch
          %363 = sbr.rel (%p361) target = $region44
        $region43: #{tpu_custom_call.1} parent=27 // pred_region
          %p364 = scmp.lt.s32.totalorder %s30, 1
          %s365 = scalar_select %p364, %s30, 1
          %s366 = scalar_lea.vmem %s3, %s365
        $region44: #{tpu_custom_call.1} parent=27 // pred_fallthru
          _
      $region28: #{tpu_custom_call.1} parent=5 // pred_fallthru
        _
      %p367 = scmp.le.s32.totalorder 1, %s23
      %p368 = scmp.lt.s32.totalorder %s23, 7
      %p369 = pnand %p367, %p368
      %p370 = pneg %p369
      // Predicated region
      $region45: #{tpu_custom_call.1} parent=5 // pred_check
        _
      $region46: #{tpu_custom_call.1} parent=5 // pred_check_branch
        %372 = sbr.rel (%p369) target = $region48
      $region47: #{tpu_custom_call.1} parent=5 // pred_region
        %s373 = ssub.s32 %s23, 1
        %s374 = sand.u32 %s50, 1
        %s375 = scalar_lea.sflag [#allocation4], %s374
        %s376 = sand.u32 %s50, 1
        %s377 = smul.addr %s376, 8
        %s378 = scalar_lea.vmem [#allocation3], %s377
        // Predicated region
        $region49: #{tpu_custom_call.1} parent=47 // pred_check
          %p379 = pneg %p63
        $region50: #{tpu_custom_call.1} parent=47 // pred_check_branch
          %381 = sbr.rel (%p379) target = $region52
        $region51: #{tpu_custom_call.1} parent=47 // pred_region
          %382 = dma.done %s375, 128
        $region52: #{tpu_custom_call.1} parent=47 // pred_fallthru
          _
        %s383 = sand.u32 %s28, 1
        %s384 = scalar_lea.sflag [#allocation7], %s383
        %s385 = sand.u32 %s84, 1
        %s386 = smul.addr %s385, 8
        %s387 = scalar_lea.vmem [#allocation6], %s386
        // Predicated region
        $region53: #{tpu_custom_call.1} parent=47 // pred_check
          %p388 = pneg %p97
        $region54: #{tpu_custom_call.1} parent=47 // pred_check_branch
          %390 = sbr.rel (%p388) target = $region56
        $region55: #{tpu_custom_call.1} parent=47 // pred_region
          %391 = dma.done %s384, 128
        $region56: #{tpu_custom_call.1} parent=47 // pred_fallthru
          _
        %s392 = sand.u32 %s28, 1
        %s393 = scalar_lea.sflag [#allocation7], %s392
        %s394 = sand.u32 %s118, 1
        %s395 = smul.addr %s394, 8
        %s396 = scalar_lea.vmem [#allocation8], %s395
        // Predicated region
        $region57: #{tpu_custom_call.1} parent=47 // pred_check
          %p397 = pneg %p131
        $region58: #{tpu_custom_call.1} parent=47 // pred_check_branch
          %399 = sbr.rel (%p397) target = $region60
        $region59: #{tpu_custom_call.1} parent=47 // pred_region
          %400 = dma.done %s393, 128
        $region60: #{tpu_custom_call.1} parent=47 // pred_fallthru
          _
        // Predicated region
        $region61: #{tpu_custom_call.1} parent=47 // pred_check
          %p401 = pneg %p178
        $region62: #{tpu_custom_call.1} parent=47 // pred_check_branch
          %403 = sbr.rel (%p401) target = $region64
        $region63: #{tpu_custom_call.1} parent=47 // pred_region
          %404 = dma.done [#allocation10], 3072
        $region64: #{tpu_custom_call.1} parent=47 // pred_fallthru
          _
        %s405 = sand.u32 %s50, 1
        %s406 = scalar_lea.sflag [#allocation4], %s405
        %s407 = sand.u32 %s50, 1
        %s408 = smul.addr %s407, 8
        %s409 = scalar_lea.vmem [#allocation3], %s408
        %p410 = pneg %p63
        %p411 = pneg %p60
        %s412 = sand.u32 %s28, 1
        %s413 = scalar_lea.sflag [#allocation7], %s412
        %s414 = sand.u32 %s84, 1
        %s415 = smul.addr %s414, 8
        %s416 = scalar_lea.vmem [#allocation6], %s415
        %p417 = pneg %p97
        %p418 = pneg %p94
        %s419 = sand.u32 %s28, 1
        %s420 = scalar_lea.sflag [#allocation7], %s419
        %s421 = sand.u32 %s118, 1
        %s422 = smul.addr %s421, 8
        %s423 = scalar_lea.vmem [#allocation8], %s422
        %p424 = pneg %p131
        %p425 = pneg %p128
        %p426 = scmp.lt.s32.totalorder %s32, 1
        %s427 = scalar_select %p426, %s32, 1
        %s428 = scalar_lea.vmem %s3, %s427
        %p429 = pneg %p157
        %p430 = pneg %p154
        %p431 = pneg %p178
        %p432 = pneg %p175
        %p433 = pneg %p199
        %p434 = pneg %p196
        %p435 = pneg %p220
        %p436 = pneg %p217
        %p437 = pneg %p248
        %p438 = pneg %p245
        %s439 = sand.u32 %s235, 1
        %s440 = scalar_lea.sflag [#allocation5], %s439
        %s441 = sand.u32 %s235, 1
        %s442 = smul.addr %s441, 8
        %s443 = scalar_lea.vmem [#allocation11], %s442
        %s444 = smul.u32 2, %s33
        %s445 = ssub.s32 %s33, 1
        %p446 = scmp.gt.s32.totalorder %s445, 0
        %s447 = scalar_select %p446, %s445, 0
        %s448 = smul.u32 2, %s447
        %s449 = sadd.s32 %s33, 1
        %p450 = scmp.lt.s32.totalorder %s449, 2
        %s451 = scalar_select %p450, %s449, 2
        %s452 = smul.u32 2, %s451
        %p453 = scmp.lt.s32.totalorder %s32, 1
        %s454 = scalar_select %p453, %s32, 1
        %s455 = scalar_lea.vmem %s3, %s454
        %s456 = smul.u32 2, %s33
        %v458 = vld [vmem:[%s455] sm:$0x1]
        %v459 = vld [vmem:[%s378] sm:$0xf]
        %v460 = vld [vmem:[%s378 + $0x4] sm:$0xf]
        %v461 = vunpack.c.l.bf16 %v459
        %v462 = vunpack.c.l.bf16 %v460
        %v464 = vlaneseq
        %v465 = vshrl.u32 %v464, 7
        %v466 = vsub.s32 0, %v465
        %v467 = vrot.slane %v458, %v466
        %v469 = vmul.f32 %v461, %v467
        %v470 = vmul.f32 %v462, %v467
        %v471 = vld [vmem:[%s387 + $0x4] sm:$0x8]
        %v472 = vunpack.c.l.bf16 %v471
        %v473 = vmul.f32 %v472, %v467
        %v474 = vld [vmem:[%s396] sm:$0x1]
        %v475 = vunpack.c.l.bf16 %v474
        %v476 = vmul.f32 %v475, %v458
        %p477 = scmp.gt.s32.totalorder %s33, 0
        %s478 = scalar_select %p477, 1, 0
        %v479 = vstv %s478
        %vm480 = vcmp.eq.s32.totalorder %v479, 1
        %v481 = vsel %vm480, %v473, 0.0
        %p482 = scmp.lt.s32.totalorder %s33, 2
        %s483 = scalar_select %p482, 1, 0
        %v484 = vstv %s483
        %vm485 = vcmp.eq.s32.totalorder %v484, 1
        %v486 = vsel %vm485, %v476, 0.0
        %487 = vst [vmem:[#allocation2 + $0x10] sm:$0xff] %v469
        %488 = vst [vmem:[#allocation2 + $0x18] sm:$0xff] %v470
        %489 = vst [vmem:[#allocation2 + $0x8] sm:$0x80] %v481
        %490 = vst [vmem:[#allocation2 + $0x20] sm:$0x1] %v486
        %v491 = vld [vmem:[#allocation2 + $0xf] sm:$0xff]
        %v492 = vld [vmem:[#allocation2 + $0x17] sm:$0xff]
        %v493 = vpack.c.bf16 %v492, %v491
        %v494 = vld [vmem:[#allocation9] sm:$0xf]
        %v495 = vld [vmem:[#allocation9 + $0x4] sm:$0xf]
        %v496 = vld [vmem:[#allocation9 + $0x8] sm:$0xf]
        %v497 = vld [vmem:[#allocation9 + $0xc] sm:$0xf]
        %v498 = vld [vmem:[#allocation9 + $0x10] sm:$0xf]
        %v499 = vld [vmem:[#allocation9 + $0x14] sm:$0xf]
        %v500 = vld [vmem:[#allocation9 + $0x18] sm:$0xf]
        %v501 = vld [vmem:[#allocation9 + $0x1c] sm:$0xf]
        %v502 = vld [vmem:[#allocation9 + $0x20] sm:$0xf]
        %v503 = vld [vmem:[#allocation9 + $0x24] sm:$0xf]
        %v504 = vld [vmem:[#allocation9 + $0x28] sm:$0xf]
        %v505 = vld [vmem:[#allocation9 + $0x2c] sm:$0xf]
        %v506 = vld [vmem:[#allocation9 + $0x30] sm:$0xf]
        %v507 = vld [vmem:[#allocation9 + $0x34] sm:$0xf]
        %v508 = vld [vmem:[#allocation9 + $0x38] sm:$0xf]
        %v509 = vld [vmem:[#allocation9 + $0x3c] sm:$0xf]
        %v510 = vld [vmem:[#allocation2 + $0x10] sm:$0xff]
        %v511 = vld [vmem:[#allocation2 + $0x18] sm:$0xff]
        %v512 = vpack.c.bf16 %v511, %v510
        %v513 = vld [vmem:[#allocation9 + $0x40] sm:$0xf]
        %v514 = vld [vmem:[#allocation9 + $0x44] sm:$0xf]
        %v515 = vld [vmem:[#allocation9 + $0x48] sm:$0xf]
        %v516 = vld [vmem:[#allocation9 + $0x4c] sm:$0xf]
        %v517 = vld [vmem:[#allocation9 + $0x50] sm:$0xf]
        %v518 = vld [vmem:[#allocation9 + $0x54] sm:$0xf]
        %v519 = vld [vmem:[#allocation9 + $0x58] sm:$0xf]
        %v520 = vld [vmem:[#allocation9 + $0x5c] sm:$0xf]
        %v521 = vld [vmem:[#allocation9 + $0x60] sm:$0xf]
        %v522 = vld [vmem:[#allocation9 + $0x64] sm:$0xf]
        %v523 = vld [vmem:[#allocation9 + $0x68] sm:$0xf]
        %v524 = vld [vmem:[#allocation9 + $0x6c] sm:$0xf]
        %v525 = vld [vmem:[#allocation9 + $0x70] sm:$0xf]
        %v526 = vld [vmem:[#allocation9 + $0x74] sm:$0xf]
        %v527 = vld [vmem:[#allocation9 + $0x78] sm:$0xf]
        %v528 = vld [vmem:[#allocation9 + $0x7c] sm:$0xf]
        %v545 = vunpack.c.l.b16 %v513
        %v546 = vunpack.c.l.b16 %v514
        %v547 = vunpack.c.l.b16 %v515
        %v548 = vunpack.c.l.b16 %v516
        %v549 = vunpack.c.l.b16 %v517
        %v550 = vunpack.c.l.b16 %v518
        %v551 = vunpack.c.l.b16 %v519
        %v552 = vunpack.c.l.b16 %v520
        %v553 = vunpack.c.l.b16 %v521
        %v554 = vunpack.c.l.b16 %v522
        %v555 = vunpack.c.l.b16 %v523
        %v556 = vunpack.c.l.b16 %v524
        %v557 = vunpack.c.l.b16 %v525
        %v558 = vunpack.c.l.b16 %v526
        %v559 = vunpack.c.l.b16 %v527
        %v560 = vunpack.c.l.b16 %v528
        %v561 = vpack.c.b16 %v546, %v545
        %v562 = vpack.c.b16 %v548, %v547
        %v563 = vpack.c.b16 %v550, %v549
        %v564 = vpack.c.b16 %v552, %v551
        %v565 = vpack.c.b16 %v554, %v553
        %v566 = vpack.c.b16 %v556, %v555
        %v567 = vpack.c.b16 %v558, %v557
        %v568 = vpack.c.b16 %v560, %v559
        %577 = vmatprep.subr.bf16.mxu0 0
        %578 = vmatpush1.bf16.msra.mxu0 %v568
        %579 = vmatprep.subr.bf16.mxu0 0
        %580 = vmatpush1.bf16.msra.mxu0 %v567
        %581 = vmatprep.subr.bf16.mxu0 0
        %582 = vmatpush1.bf16.msra.mxu0 %v566
        %583 = vmatprep.subr.bf16.mxu0 0
        %584 = vmatpush1.bf16.msra.mxu0 %v565
        %585 = vmatprep.subr.bf16.mxu0 0
        %586 = vmatpush1.bf16.msra.mxu0 %v564
        %587 = vmatprep.subr.bf16.mxu0 0
        %588 = vmatpush1.bf16.msra.mxu0 %v563
        %589 = vmatprep.subr.bf16.mxu0 0
        %590 = vmatpush1.bf16.msra.mxu0 %v562
        %591 = vmatprep.subr.bf16.mxu0 0
        %592 = vmatpush1.bf16.msra.mxu0 %v561
        %593 = vmatprep.subr.bf16.mxu0 0
        %594 = vmatpush2.bf16.msra.mxu0 0
        %595 = vmatprep.subr.bf16.mxu0 0
        %596 = vmatpush2.bf16.msra.mxu0 0
        %597 = vmatprep.subr.bf16.mxu0 0
        %598 = vmatpush2.bf16.msra.mxu0 0
        %599 = vmatprep.subr.bf16.mxu0 0
        %600 = vmatpush2.bf16.msra.mxu0 0
        %601 = vmatprep.subr.bf16.mxu0 0
        %602 = vmatpush2.bf16.msra.mxu0 0
        %603 = vmatprep.subr.bf16.mxu0 0
        %604 = vmatpush2.bf16.msra.mxu0 0
        %605 = vmatprep.subr.bf16.mxu0 0
        %606 = vmatpush2.bf16.msra.mxu0 0
        %607 = vmatprep.subr.bf16.mxu0 0
        %608 = vmatpush2.bf16.msra.mxu0 0
        %609 = vmatprep.mubr.bf16.mxu0 0
        %610 = vmatmul.mubr.bf16.gmra.mxu0 %v512
        %v611 = vpop.f32.mrf.mxu0
        %v612 = vadd.f32 0.0, %v611
        %v613 = vpop.f32.mrf.mxu0
        %v614 = vpop.f32.mrf.mxu0
        %v615 = vadd.f32 0.0, %v614
        %v616 = vpop.f32.mrf.mxu0
        %617 = vdwg.mxu0
        %v634 = vunpack.c.l.b16 %v494
        %v635 = vunpack.c.l.b16 %v495
        %v636 = vunpack.c.l.b16 %v496
        %v637 = vunpack.c.l.b16 %v497
        %v638 = vunpack.c.l.b16 %v498
        %v639 = vunpack.c.l.b16 %v499
        %v640 = vunpack.c.l.b16 %v500
        %v641 = vunpack.c.l.b16 %v501
        %v642 = vunpack.c.l.b16 %v502
        %v643 = vunpack.c.l.b16 %v503
        %v644 = vunpack.c.l.b16 %v504
        %v645 = vunpack.c.l.b16 %v505
        %v646 = vunpack.c.l.b16 %v506
        %v647 = vunpack.c.l.b16 %v507
        %v648 = vunpack.c.l.b16 %v508
        %v649 = vunpack.c.l.b16 %v509
        %v650 = vpack.c.b16 %v635, %v634
        %v651 = vpack.c.b16 %v637, %v636
        %v652 = vpack.c.b16 %v639, %v638
        %v653 = vpack.c.b16 %v641, %v640
        %v654 = vpack.c.b16 %v643, %v642
        %v655 = vpack.c.b16 %v645, %v644
        %v656 = vpack.c.b16 %v647, %v646
        %v657 = vpack.c.b16 %v649, %v648
        %666 = vmatprep.subr.bf16.mxu0 0
        %667 = vmatpush1.bf16.msra.mxu0 %v657
        %668 = vmatprep.subr.bf16.mxu0 0
        %669 = vmatpush1.bf16.msra.mxu0 %v656
        %670 = vmatprep.subr.bf16.mxu0 0
        %671 = vmatpush1.bf16.msra.mxu0 %v655
        %672 = vmatprep.subr.bf16.mxu0 0
        %673 = vmatpush1.bf16.msra.mxu0 %v654
        %674 = vmatprep.subr.bf16.mxu0 0
        %675 = vmatpush1.bf16.msra.mxu0 %v653
        %676 = vmatprep.subr.bf16.mxu0 0
        %677 = vmatpush1.bf16.msra.mxu0 %v652
        %678 = vmatprep.subr.bf16.mxu0 0
        %679 = vmatpush1.bf16.msra.mxu0 %v651
        %680 = vmatprep.subr.bf16.mxu0 0
        %681 = vmatpush1.bf16.msra.mxu0 %v650
        %682 = vmatprep.subr.bf16.mxu0 0
        %683 = vmatpush2.bf16.msra.mxu0 0
        %684 = vmatprep.subr.bf16.mxu0 0
        %685 = vmatpush2.bf16.msra.mxu0 0
        %686 = vmatprep.subr.bf16.mxu0 0
        %687 = vmatpush2.bf16.msra.mxu0 0
        %688 = vmatprep.subr.bf16.mxu0 0
        %689 = vmatpush2.bf16.msra.mxu0 0
        %690 = vmatprep.subr.bf16.mxu0 0
        %691 = vmatpush2.bf16.msra.mxu0 0
        %692 = vmatprep.subr.bf16.mxu0 0
        %693 = vmatpush2.bf16.msra.mxu0 0
        %694 = vmatprep.subr.bf16.mxu0 0
        %695 = vmatpush2.bf16.msra.mxu0 0
        %696 = vmatprep.subr.bf16.mxu0 0
        %697 = vmatpush2.bf16.msra.mxu0 0
        %698 = vmatprep.mubr.bf16.mxu0 0
        %699 = vmatmul.mubr.bf16.gmra.mxu0 %v493
        %v700 = vpop.f32.mrf.mxu0
        %v701 = vadd.f32 %v612, %v700
        %v702 = vpop.f32.mrf.mxu0
        %v703 = vpop.f32.mrf.mxu0
        %v704 = vadd.f32 %v615, %v703
        %v705 = vpop.f32.mrf.mxu0
        %706 = vdwg.mxu0
        %v707 = vld [vmem:[#allocation2 + $0x11] sm:$0xff]
        %v708 = vld [vmem:[#allocation2 + $0x19] sm:$0xff]
        %v709 = vpack.c.bf16 %v708, %v707
        %v710 = vld [vmem:[#allocation9 + $0x80] sm:$0xf]
        %v711 = vld [vmem:[#allocation9 + $0x84] sm:$0xf]
        %v712 = vld [vmem:[#allocation9 + $0x88] sm:$0xf]
        %v713 = vld [vmem:[#allocation9 + $0x8c] sm:$0xf]
        %v714 = vld [vmem:[#allocation9 + $0x90] sm:$0xf]
        %v715 = vld [vmem:[#allocation9 + $0x94] sm:$0xf]
        %v716 = vld [vmem:[#allocation9 + $0x98] sm:$0xf]
        %v717 = vld [vmem:[#allocation9 + $0x9c] sm:$0xf]
        %v718 = vld [vmem:[#allocation9 + $0xa0] sm:$0xf]
        %v719 = vld [vmem:[#allocation9 + $0xa4] sm:$0xf]
        %v720 = vld [vmem:[#allocation9 + $0xa8] sm:$0xf]
        %v721 = vld [vmem:[#allocation9 + $0xac] sm:$0xf]
        %v722 = vld [vmem:[#allocation9 + $0xb0] sm:$0xf]
        %v723 = vld [vmem:[#allocation9 + $0xb4] sm:$0xf]
        %v724 = vld [vmem:[#allocation9 + $0xb8] sm:$0xf]
        %v725 = vld [vmem:[#allocation9 + $0xbc] sm:$0xf]
        %v742 = vunpack.c.l.b16 %v710
        %v743 = vunpack.c.l.b16 %v711
        %v744 = vunpack.c.l.b16 %v712
        %v745 = vunpack.c.l.b16 %v713
        %v746 = vunpack.c.l.b16 %v714
        %v747 = vunpack.c.l.b16 %v715
        %v748 = vunpack.c.l.b16 %v716
        %v749 = vunpack.c.l.b16 %v717
        %v750 = vunpack.c.l.b16 %v718
        %v751 = vunpack.c.l.b16 %v719
        %v752 = vunpack.c.l.b16 %v720
        %v753 = vunpack.c.l.b16 %v721
        %v754 = vunpack.c.l.b16 %v722
        %v755 = vunpack.c.l.b16 %v723
        %v756 = vunpack.c.l.b16 %v724
        %v757 = vunpack.c.l.b16 %v725
        %v758 = vpack.c.b16 %v743, %v742
        %v759 = vpack.c.b16 %v745, %v744
        %v760 = vpack.c.b16 %v747, %v746
        %v761 = vpack.c.b16 %v749, %v748
        %v762 = vpack.c.b16 %v751, %v750
        %v763 = vpack.c.b16 %v753, %v752
        %v764 = vpack.c.b16 %v755, %v754
        %v765 = vpack.c.b16 %v757, %v756
        %774 = vmatprep.subr.bf16.mxu0 0
        %775 = vmatpush1.bf16.msra.mxu0 %v765
        %776 = vmatprep.subr.bf16.mxu0 0
        %777 = vmatpush1.bf16.msra.mxu0 %v764
        %778 = vmatprep.subr.bf16.mxu0 0
        %779 = vmatpush1.bf16.msra.mxu0 %v763
        %780 = vmatprep.subr.bf16.mxu0 0
        %781 = vmatpush1.bf16.msra.mxu0 %v762
        %782 = vmatprep.subr.bf16.mxu0 0
        %783 = vmatpush1.bf16.msra.mxu0 %v761
        %784 = vmatprep.subr.bf16.mxu0 0
        %785 = vmatpush1.bf16.msra.mxu0 %v760
        %786 = vmatprep.subr.bf16.mxu0 0
        %787 = vmatpush1.bf16.msra.mxu0 %v759
        %788 = vmatprep.subr.bf16.mxu0 0
        %789 = vmatpush1.bf16.msra.mxu0 %v758
        %790 = vmatprep.subr.bf16.mxu0 0
        %791 = vmatpush2.bf16.msra.mxu0 0
        %792 = vmatprep.subr.bf16.mxu0 0
        %793 = vmatpush2.bf16.msra.mxu0 0
        %794 = vmatprep.subr.bf16.mxu0 0
        %795 = vmatpush2.bf16.msra.mxu0 0
        %796 = vmatprep.subr.bf16.mxu0 0
        %797 = vmatpush2.bf16.msra.mxu0 0
        %798 = vmatprep.subr.bf16.mxu0 0
        %799 = vmatpush2.bf16.msra.mxu0 0
        %800 = vmatprep.subr.bf16.mxu0 0
        %801 = vmatpush2.bf16.msra.mxu0 0
        %802 = vmatprep.subr.bf16.mxu0 0
        %803 = vmatpush2.bf16.msra.mxu0 0
        %804 = vmatprep.subr.bf16.mxu0 0
        %805 = vmatpush2.bf16.msra.mxu0 0
        %806 = vmatprep.mubr.bf16.mxu0 0
        %807 = vmatmul.mubr.bf16.gmra.mxu0 %v709
        %v808 = vpop.f32.mrf.mxu0
        %v809 = vadd.f32 0.0, %v808
        %v810 = vpop.f32.mrf.mxu0
        %v811 = vpop.f32.mrf.mxu0
        %v812 = vadd.f32 0.0, %v811
        %v813 = vpop.f32.mrf.mxu0
        %814 = vdwg.mxu0
        %v815 = vadd.f32 %v701, %v809
        %v816 = vadd.f32 %v704, %v812
        %v817 = vld [vmem:[%s5] sm:$0x1]
        %v819 = vlaneseq
        %v820 = vshrl.u32 %v819, 7
        %v821 = vsub.s32 0, %v820
        %v822 = vrot.slane %v817, %v821
        %v824 = vmul.f32 %v815, %v822
        %v825 = vmul.f32 %v816, %v822
        %v826 = vld [vmem:[%s6] sm:$0x1]
        %v828 = vlaneseq
        %v829 = vshrl.u32 %v828, 7
        %v830 = vsub.s32 0, %v829
        %v831 = vrot.slane %v826, %v830
        %v833 = vadd.f32 %v824, %v831
        %v834 = vadd.f32 %v825, %v831
        %v835 = vmax.f32 %v833, 0.0
        %v836 = vmax.f32 %v834, 0.0
        %s837 = smul.u32 %s33, 16
        %v838 = vlaneseq
        %v839 = vshrl.u32 %v838, 7
        %v840 = vadd.s32 %v839, 8
        %v841 = vstv %s837
        %v842 = vadd.s32 %v841, %v839
        %v843 = vadd.s32 %v841, %v840
        %vm844 = vcmp.lt.s32.totalorder %v842, 40
        %vm845 = vcmp.lt.s32.totalorder %v843, 40
        %v846 = vsel %vm844, 1, 0
        %v847 = vsel %vm845, 1, 0
        %vm848 = vcmp.eq.s32.totalorder %v846, 1
        %vm849 = vcmp.eq.s32.totalorder %v847, 1
        %v850 = vsel %vm848, %v835, 0.0
        %v851 = vsel %vm849, %v836, 0.0
        %v852 = vpack.c.bf16 %v851, %v850
        %v854 = vunpack.c.l.b16 %v852
        %v855 = vunpack.c.h.b16 %v852
        %v856 = vpack.c.b16 %v854, %v854
        %v857 = vpack.c.b16 %v855, %v855
        %860 = vst [vmem:[%s443] sm:$0xf] %v856
        %861 = vst [vmem:[%s443 + $0x4] sm:$0xf] %v857
        %s862 = sand.u32 %s235, 1
        %s863 = scalar_lea.sflag [#allocation5], %s862
        %s864 = sand.u32 %s235, 1
        %s865 = smul.addr %s864, 8
        %s866 = scalar_lea.vmem [#allocation11], %s865
        // Predicated region
        $region65: #{tpu_custom_call.1} parent=47 // pred_check
          %p867 = pneg %p245
        $region66: #{tpu_custom_call.1} parent=47 // pred_check_branch
          %869 = sbr.rel (%p867) target = $region68
        $region67: #{tpu_custom_call.1} parent=47 // pred_region
          %s870 = smul.u32 2, %s33
          %s872 = ssub.s32 128, 128
          %873 = vsyncadd %s863, %s872
          %s874 = smul.addr %s32, 6
          %s875 = sadd.s32 %s870, %s874
          %s876 = smul.addr %s875, 64
          %s877 = scalar_lea.hbm %s7, %s876
          %s878 = sshll.u32 %s866, 4
          %s879 = int_to_ptr.vmem [resolvable:$true] %s878
          %884 = dma.vmem_to_hbm [thread:$0]  %s879, 128, %s877, %s863, 64, 64, 4
        $region68: #{tpu_custom_call.1} parent=47 // pred_fallthru
          _
      $region48: #{tpu_custom_call.1} parent=5 // pred_fallthru
        _
      %p885 = scmp.le.s32.totalorder 2, %s23
      // Predicated region
      $region69: #{tpu_custom_call.1} parent=5 // pred_check
        %p886 = pneg %p885
      $region70: #{tpu_custom_call.1} parent=5 // pred_check_branch
        %888 = sbr.rel (%p886) target = $region72
      $region71: #{tpu_custom_call.1} parent=5 // pred_region
        %s889 = ssub.s32 %s23, 2
        // Predicated region
        $region73: #{tpu_custom_call.1} parent=71 // pred_check
          %p890 = pneg %p251
        $region74: #{tpu_custom_call.1} parent=71 // pred_check_branch
          %892 = sbr.rel (%p890) target = $region76
        $region75: #{tpu_custom_call.1} parent=71 // pred_region
          %s893 = sand.u32 %s236, 1
          %s894 = scalar_lea.sflag [#allocation5], %s893
          %s895 = sand.u32 %s236, 1
          %s896 = smul.addr %s895, 8
          %s897 = scalar_lea.vmem [#allocation11], %s896
          %898 = dma.done %s894, 128
        $region76: #{tpu_custom_call.1} parent=71 // pred_fallthru
          _
      $region72: #{tpu_custom_call.1} parent=5 // pred_fallthru
        _
    $region6: #{tpu_custom_call.1} parent=1 // loop_footer
      %s27 = sadd.s32 1, %s23
    $region7: #{tpu_custom_call.1} parent=1 // loop_footer_branch
      %22 = sbr.rel target = $region3
    $region8: #{tpu_custom_call.1} parent=1 // loop_exit
      _
    %899 = vsyncpa [#allocation4], 1
    %s900 = scalar_lea.sflag [#allocation4], 1
    %901 = vsyncpa %s900, 1
    %902 = vsyncpa [#allocation7], 1
    %s903 = scalar_lea.sflag [#allocation7], 1
    %904 = vsyncpa %s903, 1
    %905 = vsyncpa [#allocation10], 1
    %906 = vsyncpa [#allocation5], 1
    %s907 = scalar_lea.sflag [#allocation5], 1
    %908 = vsyncpa %s907, 1

</llo_original>
